<compile_context>
chip_gen: v5e
topology: v5e:2x2
jax: 0.10.0
libtpu: 0.0.40
codegen_flags: <defaults>
</compile_context>

<pallas_src>
import functools

import jax
import jax.numpy as jnp
from jax.experimental import pallas as pl
from jax.experimental.pallas import tpu as pltpu


# ---------------------------------------------------------------------------
# Pass 1: LayerNorm + Q/K/V projections + SwiGLU feed-forward (row tiled).
# ---------------------------------------------------------------------------
def proj_ffn_kernel(x_ref, g_ref, beta_ref,
                    wq_ref, wk_ref, wv_ref,
                    w1x_ref, w1g_ref, b1x_ref, b1g_ref, w2_ref, b2_ref,
                    q_ref, k_ref, v_ref, ff_ref, *, scale):
    cdt = x_ref.dtype                                    # MXU operand dtype

    # LayerNorm statistics in f32 (eps matches PyTorch default 1e-5).
    x = x_ref[...].astype(jnp.float32)                   # (tr, D)
    mu = jnp.mean(x, axis=-1, keepdims=True)
    var = jnp.mean(jnp.square(x - mu), axis=-1, keepdims=True)
    xn = (x - mu) * jax.lax.rsqrt(var + 1e-5)
    xn = xn * g_ref[...].astype(jnp.float32) + beta_ref[...].astype(jnp.float32)
    xn = xn.astype(cdt)

    # Q / K / V projections (bias-free Linear).  SDPA scale folded into q here.
    q = jnp.dot(xn, wq_ref[...], preferred_element_type=jnp.float32) * scale
    k = jnp.dot(xn, wk_ref[...], preferred_element_type=jnp.float32)
    v = jnp.dot(xn, wv_ref[...], preferred_element_type=jnp.float32)
    q_ref[...] = q.astype(q_ref.dtype)
    k_ref[...] = k.astype(k_ref.dtype)
    v_ref[...] = v.astype(v_ref.dtype)

    # SwiGLU feed-forward on the *normed* input (the reference reassigns
    # x = norm(x) before self.ff(x)).  Elementwise gate math stays f32.
    hx = jnp.dot(xn, w1x_ref[...], preferred_element_type=jnp.float32) + b1x_ref[...]
    hg = jnp.dot(xn, w1g_ref[...], preferred_element_type=jnp.float32) + b1g_ref[...]
    swiglu = (hx * (hg * jax.nn.sigmoid(hg))).astype(cdt)    # x * silu(gate)
    ff = jnp.dot(swiglu, w2_ref[...], preferred_element_type=jnp.float32) + b2_ref[...]
    ff_ref[...] = ff.astype(ff_ref.dtype)


# ---------------------------------------------------------------------------
# Pass 2: flash attention (online softmax) + output projection + FFN add.
# ---------------------------------------------------------------------------
def flash_attn_kernel(q_ref, k_ref, v_ref, ff_ref, wo_ref, o_ref,
                      m_sc, l_sc, acc_sc, *, heads):
    ki = pl.program_id(2)

    @pl.when(ki == 0)
    def _():
        m_sc[...] = jnp.full(m_sc.shape, -jnp.inf, m_sc.dtype)
        l_sc[...] = jnp.zeros(l_sc.shape, l_sc.dtype)
        acc_sc[...] = jnp.zeros(acc_sc.shape, acc_sc.dtype)

    q = q_ref[...]                                       # (H, tq, Dh), scaled
    k = k_ref[...]                                       # (H, tk, Dh)
    v = v_ref[...]                                       # (H, tk, Dh)

    # Heads batched into a single MXU einsum; f32 accumulation.
    s = jnp.einsum("hqd,hkd->hqk", q, k,
                   preferred_element_type=jnp.float32)   # (H, tq, tk)

    m_prev = m_sc[...]
    m_new = jnp.maximum(m_prev, jnp.max(s, axis=-1, keepdims=True))
    alpha = jnp.exp(m_prev - m_new)
    p = jnp.exp(s - m_new)
    l_sc[...] = alpha * l_sc[...] + jnp.sum(p, axis=-1, keepdims=True)
    acc_sc[...] = alpha * acc_sc[...] + jnp.einsum(
        "hqk,hkd->hqd", p.astype(v.dtype), v, preferred_element_type=jnp.float32)
    m_sc[...] = m_new

    @pl.when(ki == pl.num_programs(2) - 1)
    def _():
        inv_l = pl.reciprocal(l_sc[...], approx=True)    # EUP slot, ~free
        o = (acc_sc[...] * inv_l).astype(q_ref.dtype)    # (H, tq, Dh)
        # Output projection accumulated per head (no concat / lane repack),
        # then add the FFN branch; single lane-dense (tq, D) store.
        out = ff_ref[...].astype(jnp.float32)            # (tq, D)
        for h in range(heads):                           # small static loop
            out = out + jnp.dot(o[h], wo_ref[h],
                                preferred_element_type=jnp.float32)
        o_ref[...] = out.astype(o_ref.dtype)


# ---------------------------------------------------------------------------
# Wrapper
# ---------------------------------------------------------------------------
def attention_forward(x, params, *, heads, dim_head,
                      row_tile=None, q_tile=None, kv_tile=None):
    B, N, D = x.shape
    inner = heads * dim_head
    ffd = params["w2"].shape[0]                          # ff_inner_dim
    cdt = x.dtype                                        # compute/operand dtype

    row_tile = row_tile or min(N, 256)
    q_tile = q_tile or min(N, 128)
    kv_tile = kv_tile or min(N, 128)
    assert N % row_tile == 0 and N % q_tile == 0 and N % kv_tile == 0
    # For production shapes, D / inner / ffd should be multiples of 128 so all
    # stores are lane-dense; the small demo uses full-array last-dim blocks.

    # Split fused weights at the wrapper -> no in-kernel activation slicing.
    wkv = params["wkv"]
    wk, wv = wkv[:, :inner], wkv[:, inner:]
    w1, b1 = params["w1"], params["b1"]
    w1x, w1g = w1[:, :ffd], w1[:, ffd:]
    b1x, b1g = b1[:, :ffd], b1[:, ffd:]
    wo_r = params["wo"].reshape(heads, dim_head, D)      # per-head out proj

    scale = dim_head ** -0.5
    vmem_cap = 32 * 1024 * 1024

    # ---- pass 1: LayerNorm + projections + FFN, grid (B, row_tiles) ----
    xmap = lambda b, r: (b, r, 0)
    wmap = lambda b, r: (0, 0)
    full2 = lambda shape: pl.BlockSpec(shape, wmap)

    q, k, v, ff = pl.pallas_call(
        functools.partial(proj_ffn_kernel, scale=scale),
        out_shape=[
            jax.ShapeDtypeStruct((B, N, inner), cdt),
            jax.ShapeDtypeStruct((B, N, inner), cdt),
            jax.ShapeDtypeStruct((B, N, inner), cdt),
            jax.ShapeDtypeStruct((B, N, D), cdt),
        ],
        grid_spec=pltpu.PrefetchScalarGridSpec(
            num_scalar_prefetch=0,
            grid=(B, N // row_tile),
            in_specs=[
                pl.BlockSpec((pl.Squeezed(), row_tile, D), xmap),   # x
                full2((1, D)), full2((1, D)),                       # gamma, beta
                full2((D, inner)), full2((D, inner)), full2((D, inner)),  # Wq Wk Wv
                full2((D, ffd)), full2((D, ffd)),                   # W1x, W1gate
                full2((1, ffd)), full2((1, ffd)),                   # b1x, b1gate
                full2((ffd, D)), full2((1, D)),                     # W2, b2
            ],
            out_specs=[
                pl.BlockSpec((pl.Squeezed(), row_tile, inner), xmap),
                pl.BlockSpec((pl.Squeezed(), row_tile, inner), xmap),
                pl.BlockSpec((pl.Squeezed(), row_tile, inner), xmap),
                pl.BlockSpec((pl.Squeezed(), row_tile, D), xmap),
            ],
        ),
        compiler_params=pltpu.CompilerParams(
            dimension_semantics=("parallel", "parallel"),
            vmem_limit_bytes=vmem_cap),
    )(x, params["gamma"], params["beta"], params["wq"], wk, wv,
      w1x, w1g, b1x, b1g, params["w2"], params["b2"])

    # ---- layout plumbing (plain XLA): b n (h d) -> b h n d ----
    def to_heads(t):
        return t.reshape(B, N, heads, dim_head).transpose(0, 2, 1, 3)
    qh, kh, vh = to_heads(q), to_heads(k), to_heads(v)

    # ---- pass 2: flash attention, grid (B, q_tiles, kv_tiles) ----
    out = pl.pallas_call(
        functools.partial(flash_attn_kernel, heads=heads),
        out_shape=jax.ShapeDtypeStruct((B, N, D), x.dtype),
        grid_spec=pltpu.PrefetchScalarGridSpec(
            num_scalar_prefetch=0,
            grid=(B, N // q_tile, N // kv_tile),
            in_specs=[
                pl.BlockSpec((pl.Squeezed(), heads, q_tile, dim_head),
                             lambda b, qi, ki: (b, 0, qi, 0)),
                pl.BlockSpec((pl.Squeezed(), heads, kv_tile, dim_head),
                             lambda b, qi, ki: (b, 0, ki, 0)),
                pl.BlockSpec((pl.Squeezed(), heads, kv_tile, dim_head),
                             lambda b, qi, ki: (b, 0, ki, 0)),
                pl.BlockSpec((pl.Squeezed(), q_tile, D),
                             lambda b, qi, ki: (b, qi, 0)),
                pl.BlockSpec((heads, dim_head, D),
                             lambda b, qi, ki: (0, 0, 0)),
            ],
            out_specs=pl.BlockSpec((pl.Squeezed(), q_tile, D),
                                   lambda b, qi, ki: (b, qi, 0)),
            scratch_shapes=[
                pltpu.VMEM((heads, q_tile, 1), jnp.float32),          # m
                pltpu.VMEM((heads, q_tile, 1), jnp.float32),          # l
                pltpu.VMEM((heads, q_tile, dim_head), jnp.float32),   # acc
            ],
        ),
        compiler_params=pltpu.CompilerParams(
            dimension_semantics=("parallel", "parallel", "arbitrary"),
            vmem_limit_bytes=vmem_cap),
    )(qh, kh, vh, ff, wo_r)
    return out


# ---------------------------------------------------------------------------
# Pure-JAX reference mirroring the PyTorch module semantics.
# ---------------------------------------------------------------------------
def reference_forward(x, params, *, heads, dim_head):
    mu = jnp.mean(x, axis=-1, keepdims=True)
    var = jnp.mean((x - mu) ** 2, axis=-1, keepdims=True)
    xn = (x - mu) / jnp.sqrt(var + 1e-5) * params["gamma"][0] + params["beta"][0]

    q = xn @ params["wq"]
    kv = xn @ params["wkv"]
    inner = heads * dim_head
    k, v = kv[..., :inner], kv[..., inner:]

    def split(t):  # b n (h d) -> b h n d
        b, n, _ = t.shape
        return t.reshape(b, n, heads, dim_head).transpose(0, 2, 1, 3)

    qh, kh, vh = split(q), split(k), split(v)
    s = jnp.einsum("bhnd,bhmd->bhnm", qh, kh) * (dim_head ** -0.5)
    p = jax.nn.softmax(s, axis=-1)
    o = jnp.einsum("bhnm,bhmd->bhnd", p, vh)
    o = o.transpose(0, 2, 1, 3).reshape(x.shape[0], x.shape[1], inner)
    attn = o @ params["wo"]

    h1 = xn @ params["w1"] + params["b1"][0]
    ffd = params["w2"].shape[0]
    ff = (h1[..., :ffd] * jax.nn.silu(h1[..., ffd:])) @ params["w2"] + params["b2"][0]
    return attn + ff


if __name__ == "__main__":
    # Small, module-consistent shapes (N=16 so the 8-wide tiles are exercised).
    B, N, dim = 2, 16, 32
    heads, dim_head, ff_mult = 2, 16, 4
    inner = heads * dim_head
    ffd = ff_mult * dim

    key = jax.random.PRNGKey(0)
    ks = jax.random.split(key, 9)
    params = {
        "gamma": jnp.ones((1, dim), jnp.float32),
        "beta": jnp.zeros((1, dim), jnp.float32),
        "wq": jax.random.normal(ks[1], (dim, inner), jnp.float32) * 0.05,
        "wkv": jax.random.normal(ks[2], (dim, 2 * inner), jnp.float32) * 0.05,
        "wo": jax.random.normal(ks[3], (inner, dim), jnp.float32) * 0.05,
        "w1": jax.random.normal(ks[4], (dim, 2 * ffd), jnp.float32) * 0.05,
        "b1": jax.random.normal(ks[5], (1, 2 * ffd), jnp.float32) * 0.01,
        "w2": jax.random.normal(ks[6], (ffd, dim), jnp.float32) * 0.05,
        "b2": jax.random.normal(ks[7], (1, dim), jnp.float32) * 0.01,
    }
    x = jax.random.normal(ks[8], (B, N, dim), jnp.float32)

    out = attention_forward(x, params, heads=heads, dim_head=dim_head,
                            row_tile=8, q_tile=8, kv_tile=8)
    out = jax.block_until_ready(out)

    ref = reference_forward(x, params, heads=heads, dim_head=dim_head)
    assert out.shape == (B, N, dim)
    err = float(jnp.max(jnp.abs(out - ref)))
    assert jnp.allclose(out, ref, atol=5e-4, rtol=5e-3), f"max abs err {err}"

    print("KERNEL_OK")
</pallas_src>

<mosaic_0001>
module attributes {stable_mosaic.version = 11 : i64} {
  func.func @proj_ffn_kernel(%arg0: i32, %arg1: i32, %arg2: memref<1x8x32xf32, #tpu.memory_space<vmem>>, %arg3: memref<1x32xf32, #tpu.memory_space<vmem>>, %arg4: memref<1x32xf32, #tpu.memory_space<vmem>>, %arg5: memref<32x32xf32, #tpu.memory_space<vmem>>, %arg6: memref<32x32xf32, #tpu.memory_space<vmem>>, %arg7: memref<32x32xf32, #tpu.memory_space<vmem>>, %arg8: memref<32x128xf32, #tpu.memory_space<vmem>>, %arg9: memref<32x128xf32, #tpu.memory_space<vmem>>, %arg10: memref<1x128xf32, #tpu.memory_space<vmem>>, %arg11: memref<1x128xf32, #tpu.memory_space<vmem>>, %arg12: memref<128x32xf32, #tpu.memory_space<vmem>>, %arg13: memref<1x32xf32, #tpu.memory_space<vmem>>, %arg14: memref<1x8x32xf32, #tpu.memory_space<vmem>>, %arg15: memref<1x8x32xf32, #tpu.memory_space<vmem>>, %arg16: memref<1x8x32xf32, #tpu.memory_space<vmem>>, %arg17: memref<1x8x32xf32, #tpu.memory_space<vmem>>) attributes {dimension_semantics = [#tpu.dimension_semantics<parallel>, #tpu.dimension_semantics<parallel>], iteration_bounds = array<i64: 2, 2>, scalar_prefetch = 0 : i64, scratch_operands = 0 : i64, tpu.core_type = #tpu.core_type<tc>, window_params = [{transform_indices = @transform_0, window_bounds = array<i64: 1, 8, 32>}, {pipeline_mode = #tpu.pipeline_mode<synchronous>, transform_indices = @transform_1, window_bounds = array<i64: 1, 32>}, {pipeline_mode = #tpu.pipeline_mode<synchronous>, transform_indices = @transform_2, window_bounds = array<i64: 1, 32>}, {pipeline_mode = #tpu.pipeline_mode<synchronous>, transform_indices = @transform_3, window_bounds = array<i64: 32, 32>}, {pipeline_mode = #tpu.pipeline_mode<synchronous>, transform_indices = @transform_4, window_bounds = array<i64: 32, 32>}, {pipeline_mode = #tpu.pipeline_mode<synchronous>, transform_indices = @transform_5, window_bounds = array<i64: 32, 32>}, {pipeline_mode = #tpu.pipeline_mode<synchronous>, transform_indices = @transform_6, window_bounds = array<i64: 32, 128>}, {pipeline_mode = #tpu.pipeline_mode<synchronous>, transform_indices = @transform_7, window_bounds = array<i64: 32, 128>}, {pipeline_mode = #tpu.pipeline_mode<synchronous>, transform_indices = @transform_8, window_bounds = array<i64: 1, 128>}, {pipeline_mode = #tpu.pipeline_mode<synchronous>, transform_indices = @transform_9, window_bounds = array<i64: 1, 128>}, {pipeline_mode = #tpu.pipeline_mode<synchronous>, transform_indices = @transform_10, window_bounds = array<i64: 128, 32>}, {pipeline_mode = #tpu.pipeline_mode<synchronous>, transform_indices = @transform_11, window_bounds = array<i64: 1, 32>}, {transform_indices = @transform_12, window_bounds = array<i64: 1, 8, 32>}, {transform_indices = @transform_13, window_bounds = array<i64: 1, 8, 32>}, {transform_indices = @transform_14, window_bounds = array<i64: 1, 8, 32>}, {transform_indices = @transform_15, window_bounds = array<i64: 1, 8, 32>}]} {
    %c0 = arith.constant 0 : index
    %c0_0 = arith.constant 0 : index
    %c0_1 = arith.constant 0 : index
    %0 = vector.load %arg2[%c0, %c0_0, %c0_1] : memref<1x8x32xf32, #tpu.memory_space<vmem>>, vector<1x8x32xf32>
    %1 = vector.shape_cast %0 : vector<1x8x32xf32> to vector<8x32xf32>
    %cst = arith.constant dense<0.000000e+00> : vector<8xf32>
    %2 = vector.multi_reduction <add>, %1, %cst [1] : vector<8x32xf32> to vector<8xf32>
    %3 = vector.shape_cast %2 : vector<8xf32> to vector<8x1xf32>
    %cst_2 = arith.constant 3.200000e+01 : f32
    %4 = vector.broadcast %cst_2 : f32 to vector<8x1xf32>
    %5 = arith.divf %3, %4 : vector<8x1xf32>
    %6 = vector.broadcast %5 : vector<8x1xf32> to vector<8x32xf32>
    %7 = arith.subf %1, %6 : vector<8x32xf32>
    %8 = arith.mulf %7, %7 : vector<8x32xf32>
    %cst_3 = arith.constant dense<0.000000e+00> : vector<8xf32>
    %9 = vector.multi_reduction <add>, %8, %cst_3 [1] : vector<8x32xf32> to vector<8xf32>
    %10 = vector.shape_cast %9 : vector<8xf32> to vector<8x1xf32>
    %cst_4 = arith.constant 3.200000e+01 : f32
    %11 = vector.broadcast %cst_4 : f32 to vector<8x1xf32>
    %12 = arith.divf %10, %11 : vector<8x1xf32>
    %13 = vector.broadcast %5 : vector<8x1xf32> to vector<8x32xf32>
    %14 = arith.subf %1, %13 : vector<8x32xf32>
    %cst_5 = arith.constant 9.99999974E-6 : f32
    %15 = vector.broadcast %cst_5 : f32 to vector<8x1xf32>
    %16 = arith.addf %12, %15 : vector<8x1xf32>
    %17 = math.rsqrt %16 : vector<8x1xf32>
    %18 = vector.broadcast %17 : vector<8x1xf32> to vector<8x32xf32>
    %19 = arith.mulf %14, %18 : vector<8x32xf32>
    %c0_6 = arith.constant 0 : index
    %c0_7 = arith.constant 0 : index
    %20 = vector.load %arg3[%c0_6, %c0_7] : memref<1x32xf32, #tpu.memory_space<vmem>>, vector<1x32xf32>
    %21 = vector.broadcast %20 : vector<1x32xf32> to vector<8x32xf32>
    %22 = arith.mulf %19, %21 : vector<8x32xf32>
    %c0_8 = arith.constant 0 : index
    %c0_9 = arith.constant 0 : index
    %23 = vector.load %arg4[%c0_8, %c0_9] : memref<1x32xf32, #tpu.memory_space<vmem>>, vector<1x32xf32>
    %24 = vector.broadcast %23 : vector<1x32xf32> to vector<8x32xf32>
    %25 = arith.addf %22, %24 : vector<8x32xf32>
    %c0_10 = arith.constant 0 : index
    %c0_11 = arith.constant 0 : index
    %26 = vector.load %arg5[%c0_10, %c0_11] : memref<32x32xf32, #tpu.memory_space<vmem>>, vector<32x32xf32>
    %cst_12 = arith.constant dense<0.000000e+00> : vector<8x32xf32>
    %27 = tpu.matmul %25, %26, %cst_12 {dimension_numbers = #tpu.dot_dimension_numbers<[1], [0], [0], [1], [0, 0, 1, 1], [], []>} : vector<8x32xf32>, vector<32x32xf32>, vector<8x32xf32> -> vector<8x32xf32>
    %cst_13 = arith.constant 2.500000e-01 : f32
    %28 = vector.broadcast %cst_13 : f32 to vector<8x32xf32>
    %29 = arith.mulf %27, %28 : vector<8x32xf32>
    %c0_14 = arith.constant 0 : index
    %c0_15 = arith.constant 0 : index
    %30 = vector.load %arg6[%c0_14, %c0_15] : memref<32x32xf32, #tpu.memory_space<vmem>>, vector<32x32xf32>
    %cst_16 = arith.constant dense<0.000000e+00> : vector<8x32xf32>
    %31 = tpu.matmul %25, %30, %cst_16 {dimension_numbers = #tpu.dot_dimension_numbers<[1], [0], [0], [1], [0, 0, 1, 1], [], []>} : vector<8x32xf32>, vector<32x32xf32>, vector<8x32xf32> -> vector<8x32xf32>
    %c0_17 = arith.constant 0 : index
    %c0_18 = arith.constant 0 : index
    %32 = vector.load %arg7[%c0_17, %c0_18] : memref<32x32xf32, #tpu.memory_space<vmem>>, vector<32x32xf32>
    %cst_19 = arith.constant dense<0.000000e+00> : vector<8x32xf32>
    %33 = tpu.matmul %25, %32, %cst_19 {dimension_numbers = #tpu.dot_dimension_numbers<[1], [0], [0], [1], [0, 0, 1, 1], [], []>} : vector<8x32xf32>, vector<32x32xf32>, vector<8x32xf32> -> vector<8x32xf32>
    %c0_20 = arith.constant 0 : index
    %c0_21 = arith.constant 0 : index
    %c0_22 = arith.constant 0 : index
    %34 = vector.load %arg14[%c0_20, %c0_21, %c0_22] : memref<1x8x32xf32, #tpu.memory_space<vmem>>, vector<1x8x32xf32>
    %35 = vector.shape_cast %34 : vector<1x8x32xf32> to vector<8x32xf32>
    %36 = vector.shape_cast %29 : vector<8x32xf32> to vector<1x8x32xf32>
    tpu.vector_store %arg14[%c0_20, %c0_21, %c0_22], %36 {strides = array<i32>} : memref<1x8x32xf32, #tpu.memory_space<vmem>>, vector<1x8x32xf32>,
    %c0_23 = arith.constant 0 : index
    %c0_24 = arith.constant 0 : index
    %c0_25 = arith.constant 0 : index
    %37 = vector.load %arg15[%c0_23, %c0_24, %c0_25] : memref<1x8x32xf32, #tpu.memory_space<vmem>>, vector<1x8x32xf32>
    %38 = vector.shape_cast %37 : vector<1x8x32xf32> to vector<8x32xf32>
    %39 = vector.shape_cast %31 : vector<8x32xf32> to vector<1x8x32xf32>
    tpu.vector_store %arg15[%c0_23, %c0_24, %c0_25], %39 {strides = array<i32>} : memref<1x8x32xf32, #tpu.memory_space<vmem>>, vector<1x8x32xf32>,
    %c0_26 = arith.constant 0 : index
    %c0_27 = arith.constant 0 : index
    %c0_28 = arith.constant 0 : index
    %40 = vector.load %arg16[%c0_26, %c0_27, %c0_28] : memref<1x8x32xf32, #tpu.memory_space<vmem>>, vector<1x8x32xf32>
    %41 = vector.shape_cast %40 : vector<1x8x32xf32> to vector<8x32xf32>
    %42 = vector.shape_cast %33 : vector<8x32xf32> to vector<1x8x32xf32>
    tpu.vector_store %arg16[%c0_26, %c0_27, %c0_28], %42 {strides = array<i32>} : memref<1x8x32xf32, #tpu.memory_space<vmem>>, vector<1x8x32xf32>,
    %c0_29 = arith.constant 0 : index
    %c0_30 = arith.constant 0 : index
    %43 = vector.load %arg8[%c0_29, %c0_30] : memref<32x128xf32, #tpu.memory_space<vmem>>, vector<32x128xf32>
    %cst_31 = arith.constant dense<0.000000e+00> : vector<8x128xf32>
    %44 = tpu.matmul %25, %43, %cst_31 {dimension_numbers = #tpu.dot_dimension_numbers<[1], [0], [0], [1], [0, 0, 1, 1], [], []>} : vector<8x32xf32>, vector<32x128xf32>, vector<8x128xf32> -> vector<8x128xf32>
    %c0_32 = arith.constant 0 : index
    %c0_33 = arith.constant 0 : index
    %45 = vector.load %arg10[%c0_32, %c0_33] : memref<1x128xf32, #tpu.memory_space<vmem>>, vector<1x128xf32>
    %46 = vector.broadcast %45 : vector<1x128xf32> to vector<8x128xf32>
    %47 = arith.addf %44, %46 : vector<8x128xf32>
    %c0_34 = arith.constant 0 : index
    %c0_35 = arith.constant 0 : index
    %48 = vector.load %arg9[%c0_34, %c0_35] : memref<32x128xf32, #tpu.memory_space<vmem>>, vector<32x128xf32>
    %cst_36 = arith.constant dense<0.000000e+00> : vector<8x128xf32>
    %49 = tpu.matmul %25, %48, %cst_36 {dimension_numbers = #tpu.dot_dimension_numbers<[1], [0], [0], [1], [0, 0, 1, 1], [], []>} : vector<8x32xf32>, vector<32x128xf32>, vector<8x128xf32> -> vector<8x128xf32>
    %c0_37 = arith.constant 0 : index
    %c0_38 = arith.constant 0 : index
    %50 = vector.load %arg11[%c0_37, %c0_38] : memref<1x128xf32, #tpu.memory_space<vmem>>, vector<1x128xf32>
    %51 = vector.broadcast %50 : vector<1x128xf32> to vector<8x128xf32>
    %52 = arith.addf %49, %51 : vector<8x128xf32>
    %53 = arith.negf %52 : vector<8x128xf32>
    %54 = math.exp %53 : vector<8x128xf32>
    %cst_39 = arith.constant 1.000000e+00 : f32
    %55 = vector.broadcast %cst_39 : f32 to vector<8x128xf32>
    %56 = arith.addf %55, %54 : vector<8x128xf32>
    %57 = arith.divf %55, %56 : vector<8x128xf32>
    %58 = arith.mulf %52, %57 : vector<8x128xf32>
    %59 = arith.mulf %47, %58 : vector<8x128xf32>
    %c0_40 = arith.constant 0 : index
    %c0_41 = arith.constant 0 : index
    %60 = vector.load %arg12[%c0_40, %c0_41] : memref<128x32xf32, #tpu.memory_space<vmem>>, vector<128x32xf32>
    %cst_42 = arith.constant dense<0.000000e+00> : vector<8x32xf32>
    %61 = tpu.matmul %59, %60, %cst_42 {dimension_numbers = #tpu.dot_dimension_numbers<[1], [0], [0], [1], [0, 0, 1, 1], [], []>} : vector<8x128xf32>, vector<128x32xf32>, vector<8x32xf32> -> vector<8x32xf32>
    %c0_43 = arith.constant 0 : index
    %c0_44 = arith.constant 0 : index
    %62 = vector.load %arg13[%c0_43, %c0_44] : memref<1x32xf32, #tpu.memory_space<vmem>>, vector<1x32xf32>
    %63 = vector.broadcast %62 : vector<1x32xf32> to vector<8x32xf32>
    %64 = arith.addf %61, %63 : vector<8x32xf32>
    %c0_45 = arith.constant 0 : index
    %c0_46 = arith.constant 0 : index
    %c0_47 = arith.constant 0 : index
    %65 = vector.load %arg17[%c0_45, %c0_46, %c0_47] : memref<1x8x32xf32, #tpu.memory_space<vmem>>, vector<1x8x32xf32>
    %66 = vector.shape_cast %65 : vector<1x8x32xf32> to vector<8x32xf32>
    %67 = vector.shape_cast %64 : vector<8x32xf32> to vector<1x8x32xf32>
    tpu.vector_store %arg17[%c0_45, %c0_46, %c0_47], %67 {strides = array<i32>} : memref<1x8x32xf32, #tpu.memory_space<vmem>>, vector<1x8x32xf32>,
    return
  }
  func.func @transform_0(%arg0: i32, %arg1: i32) -> (i32, i32, i32) {
    %c0_i32 = arith.constant 0 : i32
    %c0_i32_0 = arith.constant 0 : i32
    return %arg0, %arg1, %c0_i32 : i32, i32, i32
  }
  func.func @transform_1(%arg0: i32, %arg1: i32) -> (i32, i32) {
    %c0_i32 = arith.constant 0 : i32
    %c0_i32_0 = arith.constant 0 : i32
    %c0_i32_1 = arith.constant 0 : i32
    return %c0_i32, %c0_i32_0 : i32, i32
  }
  func.func @transform_2(%arg0: i32, %arg1: i32) -> (i32, i32) {
    %c0_i32 = arith.constant 0 : i32
    %c0_i32_0 = arith.constant 0 : i32
    %c0_i32_1 = arith.constant 0 : i32
    return %c0_i32, %c0_i32_0 : i32, i32
  }
  func.func @transform_3(%arg0: i32, %arg1: i32) -> (i32, i32) {
    %c0_i32 = arith.constant 0 : i32
    %c0_i32_0 = arith.constant 0 : i32
    %c0_i32_1 = arith.constant 0 : i32
    return %c0_i32, %c0_i32_0 : i32, i32
  }
  func.func @transform_4(%arg0: i32, %arg1: i32) -> (i32, i32) {
    %c0_i32 = arith.constant 0 : i32
    %c0_i32_0 = arith.constant 0 : i32
    %c0_i32_1 = arith.constant 0 : i32
    return %c0_i32, %c0_i32_0 : i32, i32
  }
  func.func @transform_5(%arg0: i32, %arg1: i32) -> (i32, i32) {
    %c0_i32 = arith.constant 0 : i32
    %c0_i32_0 = arith.constant 0 : i32
    %c0_i32_1 = arith.constant 0 : i32
    return %c0_i32, %c0_i32_0 : i32, i32
  }
  func.func @transform_6(%arg0: i32, %arg1: i32) -> (i32, i32) {
    %c0_i32 = arith.constant 0 : i32
    %c0_i32_0 = arith.constant 0 : i32
    %c0_i32_1 = arith.constant 0 : i32
    return %c0_i32, %c0_i32_0 : i32, i32
  }
  func.func @transform_7(%arg0: i32, %arg1: i32) -> (i32, i32) {
    %c0_i32 = arith.constant 0 : i32
    %c0_i32_0 = arith.constant 0 : i32
    %c0_i32_1 = arith.constant 0 : i32
    return %c0_i32, %c0_i32_0 : i32, i32
  }
  func.func @transform_8(%arg0: i32, %arg1: i32) -> (i32, i32) {
    %c0_i32 = arith.constant 0 : i32
    %c0_i32_0 = arith.constant 0 : i32
    %c0_i32_1 = arith.constant 0 : i32
    return %c0_i32, %c0_i32_0 : i32, i32
  }
  func.func @transform_9(%arg0: i32, %arg1: i32) -> (i32, i32) {
    %c0_i32 = arith.constant 0 : i32
    %c0_i32_0 = arith.constant 0 : i32
    %c0_i32_1 = arith.constant 0 : i32
    return %c0_i32, %c0_i32_0 : i32, i32
  }
  func.func @transform_10(%arg0: i32, %arg1: i32) -> (i32, i32) {
    %c0_i32 = arith.constant 0 : i32
    %c0_i32_0 = arith.constant 0 : i32
    %c0_i32_1 = arith.constant 0 : i32
    return %c0_i32, %c0_i32_0 : i32, i32
  }
  func.func @transform_11(%arg0: i32, %arg1: i32) -> (i32, i32) {
    %c0_i32 = arith.constant 0 : i32
    %c0_i32_0 = arith.constant 0 : i32
    %c0_i32_1 = arith.constant 0 : i32
    return %c0_i32, %c0_i32_0 : i32, i32
  }
  func.func @transform_12(%arg0: i32, %arg1: i32) -> (i32, i32, i32) {
    %c0_i32 = arith.constant 0 : i32
    %c0_i32_0 = arith.constant 0 : i32
    return %arg0, %arg1, %c0_i32 : i32, i32, i32
  }
  func.func @transform_13(%arg0: i32, %arg1: i32) -> (i32, i32, i32) {
    %c0_i32 = arith.constant 0 : i32
    %c0_i32_0 = arith.constant 0 : i32
    return %arg0, %arg1, %c0_i32 : i32, i32, i32
  }
  func.func @transform_14(%arg0: i32, %arg1: i32) -> (i32, i32, i32) {
    %c0_i32 = arith.constant 0 : i32
    %c0_i32_0 = arith.constant 0 : i32
    return %arg0, %arg1, %c0_i32 : i32, i32, i32
  }
  func.func @transform_15(%arg0: i32, %arg1: i32) -> (i32, i32, i32) {
    %c0_i32 = arith.constant 0 : i32
    %c0_i32_0 = arith.constant 0 : i32
    return %arg0, %arg1, %c0_i32 : i32, i32, i32
  }
}

</mosaic_0001>

<llo_original>
// kernel: tpu_custom_call.1
$region0: #{tpu_custom_call.1}
  #allocation0 [shape = 'u32[]', space=smem, size = 0x4, offset = 0x4, fixed_abs, tag = 'smem constant byte address 0x4 - core index']
  #allocation1 [shape = 'u32[72,128]{1,0:T(1,128)}', space=vmem, size = 0x9000, scoped, tag = 'internal scratch']
  %s0 = inlined_call_operand.vmem [shape: f32[2,16,32], index: 0, kind: input, shape index: {}]
  %s1 = inlined_call_operand.hbm [shape: f32[1,32], index: 1, kind: input, shape index: {}]
  %s2 = inlined_call_operand.vmem [shape: f32[1,32], index: 2, kind: input, shape index: {}]
  %s3 = inlined_call_operand.vmem [shape: f32[32,32], index: 3, kind: input, shape index: {}]
  %s4 = inlined_call_operand.vmem [shape: f32[32,32], index: 4, kind: input, shape index: {}]
  %s5 = inlined_call_operand.vmem [shape: f32[32,32], index: 5, kind: input, shape index: {}]
  %s6 = inlined_call_operand.vmem [shape: f32[32,128], index: 6, kind: input, shape index: {}]
  %s7 = inlined_call_operand.hbm [shape: f32[32,128], index: 7, kind: input, shape index: {}]
  %s8 = inlined_call_operand.vmem [shape: f32[1,128], index: 8, kind: input, shape index: {}]
  %s9 = inlined_call_operand.vmem [shape: f32[1,128], index: 9, kind: input, shape index: {}]
  %s10 = inlined_call_operand.vmem [shape: f32[128,32], index: 10, kind: input, shape index: {}]
  %s11 = inlined_call_operand.vmem [shape: f32[1,32], index: 11, kind: input, shape index: {}]
  %s12 = inlined_call_operand.hbm [shape: f32[2,16,32], index: 12, kind: output, shape index: {0}]
  %s13 = inlined_call_operand.hbm [shape: f32[2,16,32], index: 13, kind: output, shape index: {1}]
  %s14 = inlined_call_operand.hbm [shape: f32[2,16,32], index: 14, kind: output, shape index: {2}]
  %s15 = inlined_call_operand.hbm [shape: f32[2,16,32], index: 15, kind: output, shape index: {3}]
  %16 = xla_tuple %s12, %s13, %s14, %s15
  %s17 = sld [smem:[#allocation0]]
  $region113: #{tpu_custom_call.1} parent=0
    _
  %s19 = ssub.s32 1, %s17
  %s20 = scalar_select 0, %s19, %s17
  $region1: #{tpu_custom_call.1} parent=0
    #allocation2 [shape = 'u8[512]{0}', space=vmem, size = 0x400, scoped, tag = 'input window, operand 1, single buffered']
    #allocation3 [shape = 's32[2]{0}', space=sflag, size = 0x8, scoped, tag = 'scoped memory for tpu_custom_call.1']
    #allocation4 [shape = 's32[2]{0}', space=sflag, size = 0x8, scoped, tag = 'scoped memory for tpu_custom_call.1']
    #allocation5 [shape = 'u8[16384]{0}', space=vmem, size = 0x4000, scoped, tag = 'input window, operand 7, single buffered']
    #allocation6 [shape = 's32[1]{0}', space=sflag, size = 0x4, scoped, tag = 'scoped memory for tpu_custom_call.1']
    #allocation7 [shape = 'u8[8192]{0}', space=vmem, size = 0x2000, scoped, tag = 'output window, operand 0']
    #allocation8 [shape = 'u8[8192]{0}', space=vmem, size = 0x2000, scoped, tag = 'output window, operand 1']
    #allocation9 [shape = 's32[2]{0}', space=sflag, size = 0x8, scoped, tag = 'scoped memory for tpu_custom_call.1']
    #allocation10 [shape = 'u8[8192]{0}', space=vmem, size = 0x2000, scoped, tag = 'output window, operand 2']
    #allocation11 [shape = 'u8[8192]{0}', space=vmem, size = 0x2000, scoped, tag = 'output window, operand 3']
    #allocation12 [shape = 's32[2]{0}', space=sflag, size = 0x8, scoped, tag = 'scoped memory for tpu_custom_call.1']
    %21 = vsyncpa [#allocation3], 0
    %22 = vsyncpa [#allocation6], 0
    %23 = vsyncpa [#allocation4], 0
    %s24 = scalar_lea.sflag [#allocation4], 1
    %25 = vsyncpa %s24, 0
    %26 = vsyncpa [#allocation9], 0
    %s27 = scalar_lea.sflag [#allocation9], 1
    %28 = vsyncpa %s27, 0
    %29 = vsyncpa [#allocation12], 0
    %s30 = scalar_lea.sflag [#allocation12], 1
    %31 = vsyncpa %s30, 0
    loop: start=0, step=1, limit=6
    $region2: #{tpu_custom_call.1} parent=1 // loop_pre_header
      _
    $region3: #{tpu_custom_call.1} parent=1 // loop_header
      %s33 = sphi 0, %s37
      %p34 = scmp.ge.s32.totalorder %s33, 6
      %s40 = sphi 0, %s52
      %s41 = sphi 0, %s48
      %s42 = sphi 0, %s40
      %s43 = sphi 0, %s41
      %s44 = sphi 0, %s42
      %s45 = sphi 0, %s43
      %s57 = sphi 0, %s59
      %s60 = sphi 0, %s57
      %s61 = sphi 0, %s60
      %s77 = sphi 0, %s61
      %s81 = sphi 0, %s81
      %s83 = sphi 0, %s81
      %s84 = sphi 0, %s83
      %s98 = sphi 0, %s84
      %s102 = sphi 0, %s102
      %s104 = sphi 0, %s102
      %s105 = sphi 0, %s104
      %s119 = sphi 0, %s105
      %s123 = sphi 0, %s123
      %s125 = sphi 0, %s123
      %s126 = sphi 0, %s125
      %s140 = sphi 0, %s126
      %s144 = sphi 0, %s144
      %s146 = sphi 0, %s144
      %s147 = sphi 0, %s146
      %s161 = sphi 0, %s147
      %s165 = sphi 0, %s165
      %s167 = sphi 0, %s165
      %s168 = sphi 0, %s167
      %s182 = sphi 0, %s168
      %s186 = sphi 0, %s186
      %s188 = sphi 0, %s186
      %s189 = sphi 0, %s188
      %s203 = sphi 0, %s189
      %s207 = sphi 0, %s207
      %s209 = sphi 0, %s207
      %s210 = sphi 0, %s209
      %s224 = sphi 0, %s210
      %s228 = sphi 0, %s228
      %s230 = sphi 0, %s228
      %s231 = sphi 0, %s230
      %s245 = sphi 0, %s231
      %s249 = sphi 0, %s249
      %s251 = sphi 0, %s249
      %s252 = sphi 0, %s251
      %s266 = sphi 0, %s252
      %s270 = sphi 0, %s270
      %s272 = sphi 0, %s270
      %s273 = sphi 0, %s272
      %s287 = sphi 0, %s273
      %s291 = sphi 0, %s291
      %s293 = sphi 0, %s291
      %s294 = sphi 0, %s293
      %s308 = sphi 0, %s294
      %s316 = sphi 0, %s318
      %s319 = sphi 0, %s316
      %s320 = sphi 0, %s319
      %s336 = sphi 0, %s320
      %s344 = sphi 0, %s346
      %s347 = sphi 0, %s344
      %s348 = sphi 0, %s347
      %s364 = sphi 0, %s348
      %s372 = sphi 0, %s374
      %s375 = sphi 0, %s372
      %s376 = sphi 0, %s375
      %s392 = sphi 0, %s376
      %s400 = sphi 0, %s402
      %s403 = sphi 0, %s400
      %s404 = sphi 0, %s403
      %s420 = sphi 0, %s404
    $region4: #{tpu_custom_call.1} parent=1 // loop_header_branch
      %36 = sbr.rel (%p34) target = $region8
    $region5: #{tpu_custom_call.1} parent=1 // loop_body
      %s38 = ssub.s32 %s33, 1
      %s39 = ssub.s32 %s33, 2
      %s46 = sadd.s32 1, %s41
      %p47 = scmp.ge.s32.totalorder %s46, 2
      %s48 = scalar_select %p47, 0, %s46
      %s49 = sadd.s32 1, %s40
      %s50 = scalar_select %p47, %s49, %s40
      %p51 = scmp.ge.s32.totalorder %s50, 2
      %s52 = scalar_select %p51, 0, %s50
      %s53 = ssub.s32 %s40, %s52
      %s54 = ssub.s32 %s41, %s48
      %s55 = sor.u32 %s53, %s54
      %p56 = scmp.eq.s32.totalorder %s55, 0
      %s58 = sadd.s32 %s57, 1
      %s59 = scalar_select %p56, %s57, %s58
      %p62 = pneg %p56
      %p63 = scmp.eq.s32.totalorder %s33, 3
      %p64 = por %p62, %p63
      %p65 = scmp.ne.s32.totalorder %s57, %s60
      %p66 = scmp.eq.s32.totalorder %s33, 0
      %p67 = por %p65, %p66
      %p68 = scmp.ne.s32.totalorder %s57, %s60
      %p69 = scmp.eq.s32.totalorder %s38, 3
      %p70 = por %p68, %p69
      %p71 = scmp.ne.s32.totalorder %s60, %s61
      %p72 = scmp.eq.s32.totalorder %s38, 0
      %p73 = por %p71, %p72
      %p74 = scmp.ne.s32.totalorder %s60, %s61
      %p75 = scmp.eq.s32.totalorder %s39, 3
      %p76 = por %p74, %p75
      %p78 = scmp.ne.s32.totalorder %s61, %s77
      %p79 = scmp.eq.s32.totalorder %s39, 0
      %p80 = por %p78, %p79
      %s82 = sadd.s32 %s81, 1
      %p85 = scmp.eq.s32.totalorder %s33, 3
      %p86 = scmp.ne.s32.totalorder %s81, %s83
      %p87 = scmp.eq.s32.totalorder %s33, 0
      %p88 = por %p86, %p87
      %p89 = scmp.ne.s32.totalorder %s81, %s83
      %p90 = scmp.eq.s32.totalorder %s38, 3
      %p91 = por %p89, %p90
      %p92 = scmp.ne.s32.totalorder %s83, %s84
      %p93 = scmp.eq.s32.totalorder %s38, 0
      %p94 = por %p92, %p93
      %p95 = scmp.ne.s32.totalorder %s83, %s84
      %p96 = scmp.eq.s32.totalorder %s39, 3
      %p97 = por %p95, %p96
      %p99 = scmp.ne.s32.totalorder %s84, %s98
      %p100 = scmp.eq.s32.totalorder %s39, 0
      %p101 = por %p99, %p100
      %s103 = sadd.s32 %s102, 1
      %p106 = scmp.eq.s32.totalorder %s33, 3
      %p107 = scmp.ne.s32.totalorder %s102, %s104
      %p108 = scmp.eq.s32.totalorder %s33, 0
      %p109 = por %p107, %p108
      %p110 = scmp.ne.s32.totalorder %s102, %s104
      %p111 = scmp.eq.s32.totalorder %s38, 3
      %p112 = por %p110, %p111
      %p113 = scmp.ne.s32.totalorder %s104, %s105
      %p114 = scmp.eq.s32.totalorder %s38, 0
      %p115 = por %p113, %p114
      %p116 = scmp.ne.s32.totalorder %s104, %s105
      %p117 = scmp.eq.s32.totalorder %s39, 3
      %p118 = por %p116, %p117
      %p120 = scmp.ne.s32.totalorder %s105, %s119
      %p121 = scmp.eq.s32.totalorder %s39, 0
      %p122 = por %p120, %p121
      %s124 = sadd.s32 %s123, 1
      %p127 = scmp.eq.s32.totalorder %s33, 3
      %p128 = scmp.ne.s32.totalorder %s123, %s125
      %p129 = scmp.eq.s32.totalorder %s33, 0
      %p130 = por %p128, %p129
      %p131 = scmp.ne.s32.totalorder %s123, %s125
      %p132 = scmp.eq.s32.totalorder %s38, 3
      %p133 = por %p131, %p132
      %p134 = scmp.ne.s32.totalorder %s125, %s126
      %p135 = scmp.eq.s32.totalorder %s38, 0
      %p136 = por %p134, %p135
      %p137 = scmp.ne.s32.totalorder %s125, %s126
      %p138 = scmp.eq.s32.totalorder %s39, 3
      %p139 = por %p137, %p138
      %p141 = scmp.ne.s32.totalorder %s126, %s140
      %p142 = scmp.eq.s32.totalorder %s39, 0
      %p143 = por %p141, %p142
      %s145 = sadd.s32 %s144, 1
      %p148 = scmp.eq.s32.totalorder %s33, 3
      %p149 = scmp.ne.s32.totalorder %s144, %s146
      %p150 = scmp.eq.s32.totalorder %s33, 0
      %p151 = por %p149, %p150
      %p152 = scmp.ne.s32.totalorder %s144, %s146
      %p153 = scmp.eq.s32.totalorder %s38, 3
      %p154 = por %p152, %p153
      %p155 = scmp.ne.s32.totalorder %s146, %s147
      %p156 = scmp.eq.s32.totalorder %s38, 0
      %p157 = por %p155, %p156
      %p158 = scmp.ne.s32.totalorder %s146, %s147
      %p159 = scmp.eq.s32.totalorder %s39, 3
      %p160 = por %p158, %p159
      %p162 = scmp.ne.s32.totalorder %s147, %s161
      %p163 = scmp.eq.s32.totalorder %s39, 0
      %p164 = por %p162, %p163
      %s166 = sadd.s32 %s165, 1
      %p169 = scmp.eq.s32.totalorder %s33, 3
      %p170 = scmp.ne.s32.totalorder %s165, %s167
      %p171 = scmp.eq.s32.totalorder %s33, 0
      %p172 = por %p170, %p171
      %p173 = scmp.ne.s32.totalorder %s165, %s167
      %p174 = scmp.eq.s32.totalorder %s38, 3
      %p175 = por %p173, %p174
      %p176 = scmp.ne.s32.totalorder %s167, %s168
      %p177 = scmp.eq.s32.totalorder %s38, 0
      %p178 = por %p176, %p177
      %p179 = scmp.ne.s32.totalorder %s167, %s168
      %p180 = scmp.eq.s32.totalorder %s39, 3
      %p181 = por %p179, %p180
      %p183 = scmp.ne.s32.totalorder %s168, %s182
      %p184 = scmp.eq.s32.totalorder %s39, 0
      %p185 = por %p183, %p184
      %s187 = sadd.s32 %s186, 1
      %p190 = scmp.eq.s32.totalorder %s33, 3
      %p191 = scmp.ne.s32.totalorder %s186, %s188
      %p192 = scmp.eq.s32.totalorder %s33, 0
      %p193 = por %p191, %p192
      %p194 = scmp.ne.s32.totalorder %s186, %s188
      %p195 = scmp.eq.s32.totalorder %s38, 3
      %p196 = por %p194, %p195
      %p197 = scmp.ne.s32.totalorder %s188, %s189
      %p198 = scmp.eq.s32.totalorder %s38, 0
      %p199 = por %p197, %p198
      %p200 = scmp.ne.s32.totalorder %s188, %s189
      %p201 = scmp.eq.s32.totalorder %s39, 3
      %p202 = por %p200, %p201
      %p204 = scmp.ne.s32.totalorder %s189, %s203
      %p205 = scmp.eq.s32.totalorder %s39, 0
      %p206 = por %p204, %p205
      %s208 = sadd.s32 %s207, 1
      %p211 = scmp.eq.s32.totalorder %s33, 3
      %p212 = scmp.ne.s32.totalorder %s207, %s209
      %p213 = scmp.eq.s32.totalorder %s33, 0
      %p214 = por %p212, %p213
      %p215 = scmp.ne.s32.totalorder %s207, %s209
      %p216 = scmp.eq.s32.totalorder %s38, 3
      %p217 = por %p215, %p216
      %p218 = scmp.ne.s32.totalorder %s209, %s210
      %p219 = scmp.eq.s32.totalorder %s38, 0
      %p220 = por %p218, %p219
      %p221 = scmp.ne.s32.totalorder %s209, %s210
      %p222 = scmp.eq.s32.totalorder %s39, 3
      %p223 = por %p221, %p222
      %p225 = scmp.ne.s32.totalorder %s210, %s224
      %p226 = scmp.eq.s32.totalorder %s39, 0
      %p227 = por %p225, %p226
      %s229 = sadd.s32 %s228, 1
      %p232 = scmp.eq.s32.totalorder %s33, 3
      %p233 = scmp.ne.s32.totalorder %s228, %s230
      %p234 = scmp.eq.s32.totalorder %s33, 0
      %p235 = por %p233, %p234
      %p236 = scmp.ne.s32.totalorder %s228, %s230
      %p237 = scmp.eq.s32.totalorder %s38, 3
      %p238 = por %p236, %p237
      %p239 = scmp.ne.s32.totalorder %s230, %s231
      %p240 = scmp.eq.s32.totalorder %s38, 0
      %p241 = por %p239, %p240
      %p242 = scmp.ne.s32.totalorder %s230, %s231
      %p243 = scmp.eq.s32.totalorder %s39, 3
      %p244 = por %p242, %p243
      %p246 = scmp.ne.s32.totalorder %s231, %s245
      %p247 = scmp.eq.s32.totalorder %s39, 0
      %p248 = por %p246, %p247
      %s250 = sadd.s32 %s249, 1
      %p253 = scmp.eq.s32.totalorder %s33, 3
      %p254 = scmp.ne.s32.totalorder %s249, %s251
      %p255 = scmp.eq.s32.totalorder %s33, 0
      %p256 = por %p254, %p255
      %p257 = scmp.ne.s32.totalorder %s249, %s251
      %p258 = scmp.eq.s32.totalorder %s38, 3
      %p259 = por %p257, %p258
      %p260 = scmp.ne.s32.totalorder %s251, %s252
      %p261 = scmp.eq.s32.totalorder %s38, 0
      %p262 = por %p260, %p261
      %p263 = scmp.ne.s32.totalorder %s251, %s252
      %p264 = scmp.eq.s32.totalorder %s39, 3
      %p265 = por %p263, %p264
      %p267 = scmp.ne.s32.totalorder %s252, %s266
      %p268 = scmp.eq.s32.totalorder %s39, 0
      %p269 = por %p267, %p268
      %s271 = sadd.s32 %s270, 1
      %p274 = scmp.eq.s32.totalorder %s33, 3
      %p275 = scmp.ne.s32.totalorder %s270, %s272
      %p276 = scmp.eq.s32.totalorder %s33, 0
      %p277 = por %p275, %p276
      %p278 = scmp.ne.s32.totalorder %s270, %s272
      %p279 = scmp.eq.s32.totalorder %s38, 3
      %p280 = por %p278, %p279
      %p281 = scmp.ne.s32.totalorder %s272, %s273
      %p282 = scmp.eq.s32.totalorder %s38, 0
      %p283 = por %p281, %p282
      %p284 = scmp.ne.s32.totalorder %s272, %s273
      %p285 = scmp.eq.s32.totalorder %s39, 3
      %p286 = por %p284, %p285
      %p288 = scmp.ne.s32.totalorder %s273, %s287
      %p289 = scmp.eq.s32.totalorder %s39, 0
      %p290 = por %p288, %p289
      %s292 = sadd.s32 %s291, 1
      %p295 = scmp.eq.s32.totalorder %s33, 3
      %p296 = scmp.ne.s32.totalorder %s291, %s293
      %p297 = scmp.eq.s32.totalorder %s33, 0
      %p298 = por %p296, %p297
      %p299 = scmp.ne.s32.totalorder %s291, %s293
      %p300 = scmp.eq.s32.totalorder %s38, 3
      %p301 = por %p299, %p300
      %p302 = scmp.ne.s32.totalorder %s293, %s294
      %p303 = scmp.eq.s32.totalorder %s38, 0
      %p304 = por %p302, %p303
      %p305 = scmp.ne.s32.totalorder %s293, %s294
      %p306 = scmp.eq.s32.totalorder %s39, 3
      %p307 = por %p305, %p306
      %p309 = scmp.ne.s32.totalorder %s294, %s308
      %p310 = scmp.eq.s32.totalorder %s39, 0
      %p311 = por %p309, %p310
      %s312 = ssub.s32 %s40, %s52
      %s313 = ssub.s32 %s41, %s48
      %s314 = sor.u32 %s312, %s313
      %p315 = scmp.eq.s32.totalorder %s314, 0
      %s317 = sadd.s32 %s316, 1
      %s318 = scalar_select %p315, %s316, %s317
      %p321 = pneg %p315
      %p322 = scmp.eq.s32.totalorder %s33, 3
      %p323 = por %p321, %p322
      %p324 = scmp.ne.s32.totalorder %s316, %s319
      %p325 = scmp.eq.s32.totalorder %s33, 0
      %p326 = por %p324, %p325
      %p327 = scmp.ne.s32.totalorder %s316, %s319
      %p328 = scmp.eq.s32.totalorder %s38, 3
      %p329 = por %p327, %p328
      %p330 = scmp.ne.s32.totalorder %s319, %s320
      %p331 = scmp.eq.s32.totalorder %s38, 0
      %p332 = por %p330, %p331
      %p333 = scmp.ne.s32.totalorder %s319, %s320
      %p334 = scmp.eq.s32.totalorder %s39, 3
      %p335 = por %p333, %p334
      %p337 = scmp.ne.s32.totalorder %s320, %s336
      %p338 = scmp.eq.s32.totalorder %s39, 0
      %p339 = por %p337, %p338
      %s340 = ssub.s32 %s40, %s52
      %s341 = ssub.s32 %s41, %s48
      %s342 = sor.u32 %s340, %s341
      %p343 = scmp.eq.s32.totalorder %s342, 0
      %s345 = sadd.s32 %s344, 1
      %s346 = scalar_select %p343, %s344, %s345
      %p349 = pneg %p343
      %p350 = scmp.eq.s32.totalorder %s33, 3
      %p351 = por %p349, %p350
      %p352 = scmp.ne.s32.totalorder %s344, %s347
      %p353 = scmp.eq.s32.totalorder %s33, 0
      %p354 = por %p352, %p353
      %p355 = scmp.ne.s32.totalorder %s344, %s347
      %p356 = scmp.eq.s32.totalorder %s38, 3
      %p357 = por %p355, %p356
      %p358 = scmp.ne.s32.totalorder %s347, %s348
      %p359 = scmp.eq.s32.totalorder %s38, 0
      %p360 = por %p358, %p359
      %p361 = scmp.ne.s32.totalorder %s347, %s348
      %p362 = scmp.eq.s32.totalorder %s39, 3
      %p363 = por %p361, %p362
      %p365 = scmp.ne.s32.totalorder %s348, %s364
      %p366 = scmp.eq.s32.totalorder %s39, 0
      %p367 = por %p365, %p366
      %s368 = ssub.s32 %s40, %s52
      %s369 = ssub.s32 %s41, %s48
      %s370 = sor.u32 %s368, %s369
      %p371 = scmp.eq.s32.totalorder %s370, 0
      %s373 = sadd.s32 %s372, 1
      %s374 = scalar_select %p371, %s372, %s373
      %p377 = pneg %p371
      %p378 = scmp.eq.s32.totalorder %s33, 3
      %p379 = por %p377, %p378
      %p380 = scmp.ne.s32.totalorder %s372, %s375
      %p381 = scmp.eq.s32.totalorder %s33, 0
      %p382 = por %p380, %p381
      %p383 = scmp.ne.s32.totalorder %s372, %s375
      %p384 = scmp.eq.s32.totalorder %s38, 3
      %p385 = por %p383, %p384
      %p386 = scmp.ne.s32.totalorder %s375, %s376
      %p387 = scmp.eq.s32.totalorder %s38, 0
      %p388 = por %p386, %p387
      %p389 = scmp.ne.s32.totalorder %s375, %s376
      %p390 = scmp.eq.s32.totalorder %s39, 3
      %p391 = por %p389, %p390
      %p393 = scmp.ne.s32.totalorder %s376, %s392
      %p394 = scmp.eq.s32.totalorder %s39, 0
      %p395 = por %p393, %p394
      %s396 = ssub.s32 %s40, %s52
      %s397 = ssub.s32 %s41, %s48
      %s398 = sor.u32 %s396, %s397
      %p399 = scmp.eq.s32.totalorder %s398, 0
      %s401 = sadd.s32 %s400, 1
      %s402 = scalar_select %p399, %s400, %s401
      %p405 = pneg %p399
      %p406 = scmp.eq.s32.totalorder %s33, 3
      %p407 = por %p405, %p406
      %p408 = scmp.ne.s32.totalorder %s400, %s403
      %p409 = scmp.eq.s32.totalorder %s33, 0
      %p410 = por %p408, %p409
      %p411 = scmp.ne.s32.totalorder %s400, %s403
      %p412 = scmp.eq.s32.totalorder %s38, 3
      %p413 = por %p411, %p412
      %p414 = scmp.ne.s32.totalorder %s403, %s404
      %p415 = scmp.eq.s32.totalorder %s38, 0
      %p416 = por %p414, %p415
      %p417 = scmp.ne.s32.totalorder %s403, %s404
      %p418 = scmp.eq.s32.totalorder %s39, 3
      %p419 = por %p417, %p418
      %p421 = scmp.ne.s32.totalorder %s404, %s420
      %p422 = scmp.eq.s32.totalorder %s39, 0
      %p423 = por %p421, %p422
      %p424 = scmp.le.s32.totalorder 1, %s33
      %p425 = scmp.lt.s32.totalorder %s33, 5
      %p426 = pnand %p424, %p425
      %p427 = pneg %p426
      // Predicated region
      $region9: #{tpu_custom_call.1} parent=5 // pred_check
        _
      $region10: #{tpu_custom_call.1} parent=5 // pred_check_branch
        %429 = sbr.rel (%p426) target = $region12
      $region11: #{tpu_custom_call.1} parent=5 // pred_region
        %s430 = ssub.s32 %s33, 1
        // Predicated region
        $region13: #{tpu_custom_call.1} parent=11 // pred_check
          %p431 = pneg %p94
        $region14: #{tpu_custom_call.1} parent=11 // pred_check_branch
          %433 = sbr.rel (%p431) target = $region16
        $region15: #{tpu_custom_call.1} parent=11 // pred_region
          %435 = vsyncadd [#allocation3], 0
          %s437 = sshll.u32 %s1, 4
          %s438 = int_to_ptr.hbm [resolvable:$true] %s437
          %s439 = sshll.u32 [#allocation2], 4
          %s440 = int_to_ptr.vmem [resolvable:$true] %s439
          %442 = dma.hbm_to_vmem [thread:$0]  %s438, 16, %s440, [#allocation3]
        $region16: #{tpu_custom_call.1} parent=11 // pred_fallthru
          _
        // Predicated region
        $region17: #{tpu_custom_call.1} parent=11 // pred_check
          %p443 = pneg %p115
        $region18: #{tpu_custom_call.1} parent=11 // pred_check_branch
          %445 = sbr.rel (%p443) target = $region20
        $region19: #{tpu_custom_call.1} parent=11 // pred_region
          _
        $region20: #{tpu_custom_call.1} parent=11 // pred_fallthru
          _
        // Predicated region
        $region21: #{tpu_custom_call.1} parent=11 // pred_check
          %p446 = pneg %p136
        $region22: #{tpu_custom_call.1} parent=11 // pred_check_branch
          %448 = sbr.rel (%p446) target = $region24
        $region23: #{tpu_custom_call.1} parent=11 // pred_region
          _
        $region24: #{tpu_custom_call.1} parent=11 // pred_fallthru
          _
        // Predicated region
        $region25: #{tpu_custom_call.1} parent=11 // pred_check
          %p449 = pneg %p157
        $region26: #{tpu_custom_call.1} parent=11 // pred_check_branch
          %451 = sbr.rel (%p449) target = $region28
        $region27: #{tpu_custom_call.1} parent=11 // pred_region
          _
        $region28: #{tpu_custom_call.1} parent=11 // pred_fallthru
          _
        // Predicated region
        $region29: #{tpu_custom_call.1} parent=11 // pred_check
          %p452 = pneg %p178
        $region30: #{tpu_custom_call.1} parent=11 // pred_check_branch
          %454 = sbr.rel (%p452) target = $region32
        $region31: #{tpu_custom_call.1} parent=11 // pred_region
          _
        $region32: #{tpu_custom_call.1} parent=11 // pred_fallthru
          _
        // Predicated region
        $region33: #{tpu_custom_call.1} parent=11 // pred_check
          %p455 = pneg %p199
        $region34: #{tpu_custom_call.1} parent=11 // pred_check_branch
          %457 = sbr.rel (%p455) target = $region36
        $region35: #{tpu_custom_call.1} parent=11 // pred_region
          _
        $region36: #{tpu_custom_call.1} parent=11 // pred_fallthru
          _
        // Predicated region
        $region37: #{tpu_custom_call.1} parent=11 // pred_check
          %p458 = pneg %p220
        $region38: #{tpu_custom_call.1} parent=11 // pred_check_branch
          %460 = sbr.rel (%p458) target = $region40
        $region39: #{tpu_custom_call.1} parent=11 // pred_region
          %462 = vsyncadd [#allocation6], 0
          %s463 = sshll.u32 %s7, 4
          %s464 = int_to_ptr.hbm [resolvable:$true] %s463
          %s465 = sshll.u32 [#allocation5], 4
          %s466 = int_to_ptr.vmem [resolvable:$true] %s465
          %471 = dma.hbm_to_vmem [thread:$0]  %s464, 512, %s466, [#allocation6], 128, 128, 8
        $region40: #{tpu_custom_call.1} parent=11 // pred_fallthru
          _
        // Predicated region
        $region41: #{tpu_custom_call.1} parent=11 // pred_check
          %p472 = pneg %p241
        $region42: #{tpu_custom_call.1} parent=11 // pred_check_branch
          %474 = sbr.rel (%p472) target = $region44
        $region43: #{tpu_custom_call.1} parent=11 // pred_region
          _
        $region44: #{tpu_custom_call.1} parent=11 // pred_fallthru
          _
        // Predicated region
        $region45: #{tpu_custom_call.1} parent=11 // pred_check
          %p475 = pneg %p262
        $region46: #{tpu_custom_call.1} parent=11 // pred_check_branch
          %477 = sbr.rel (%p475) target = $region48
        $region47: #{tpu_custom_call.1} parent=11 // pred_region
          _
        $region48: #{tpu_custom_call.1} parent=11 // pred_fallthru
          _
        // Predicated region
        $region49: #{tpu_custom_call.1} parent=11 // pred_check
          %p478 = pneg %p283
        $region50: #{tpu_custom_call.1} parent=11 // pred_check_branch
          %480 = sbr.rel (%p478) target = $region52
        $region51: #{tpu_custom_call.1} parent=11 // pred_region
          _
        $region52: #{tpu_custom_call.1} parent=11 // pred_fallthru
          _
        // Predicated region
        $region53: #{tpu_custom_call.1} parent=11 // pred_check
          %p481 = pneg %p304
        $region54: #{tpu_custom_call.1} parent=11 // pred_check_branch
          %483 = sbr.rel (%p481) target = $region56
        $region55: #{tpu_custom_call.1} parent=11 // pred_region
          _
        $region56: #{tpu_custom_call.1} parent=11 // pred_fallthru
          _
      $region12: #{tpu_custom_call.1} parent=5 // pred_fallthru
        _
      %p484 = scmp.lt.s32.totalorder %s33, 4
      // Predicated region
      $region57: #{tpu_custom_call.1} parent=5 // pred_check
        %p485 = pneg %p484
      $region58: #{tpu_custom_call.1} parent=5 // pred_check_branch
        %487 = sbr.rel (%p485) target = $region60
      $region59: #{tpu_custom_call.1} parent=5 // pred_region
        // Predicated region
        $region61: #{tpu_custom_call.1} parent=59 // pred_check
          %p488 = pneg %p67
        $region62: #{tpu_custom_call.1} parent=59 // pred_check_branch
          %490 = sbr.rel (%p488) target = $region64
        $region63: #{tpu_custom_call.1} parent=59 // pred_region
          %p491 = scmp.lt.s32.totalorder %s40, 1
          %s492 = scalar_select %p491, %s40, 1
          %p493 = scmp.lt.s32.totalorder %s41, 1
          %s494 = scalar_select %p493, %s41, 1
          %s495 = smul.addr %s492, 2
          %s496 = sadd.s32 %s494, %s495
          %s497 = smul.addr %s496, 8
          %s498 = scalar_lea.vmem %s0, %s497
        $region64: #{tpu_custom_call.1} parent=59 // pred_fallthru
          _
      $region60: #{tpu_custom_call.1} parent=5 // pred_fallthru
        _
      %p499 = scmp.le.s32.totalorder 1, %s33
      %p500 = scmp.lt.s32.totalorder %s33, 5
      %p501 = pnand %p499, %p500
      %p502 = pneg %p501
      // Predicated region
      $region65: #{tpu_custom_call.1} parent=5 // pred_check
        _
      $region66: #{tpu_custom_call.1} parent=5 // pred_check_branch
        %504 = sbr.rel (%p501) target = $region68
      $region67: #{tpu_custom_call.1} parent=5 // pred_region
        %s505 = ssub.s32 %s33, 1
        // Predicated region
        $region69: #{tpu_custom_call.1} parent=67 // pred_check
          %p506 = pneg %p94
        $region70: #{tpu_custom_call.1} parent=67 // pred_check_branch
          %508 = sbr.rel (%p506) target = $region72
        $region71: #{tpu_custom_call.1} parent=67 // pred_region
          %510 = dma.done [#allocation3], 16
        $region72: #{tpu_custom_call.1} parent=67 // pred_fallthru
          _
        // Predicated region
        $region73: #{tpu_custom_call.1} parent=67 // pred_check
          %p511 = pneg %p220
        $region74: #{tpu_custom_call.1} parent=67 // pred_check_branch
          %513 = sbr.rel (%p511) target = $region76
        $region75: #{tpu_custom_call.1} parent=67 // pred_region
          %515 = dma.done [#allocation6], 512
        $region76: #{tpu_custom_call.1} parent=67 // pred_fallthru
          _
        %p516 = scmp.lt.s32.totalorder %s42, 1
        %s517 = scalar_select %p516, %s42, 1
        %p518 = scmp.lt.s32.totalorder %s43, 1
        %s519 = scalar_select %p518, %s43, 1
        %s520 = smul.addr %s517, 2
        %s521 = sadd.s32 %s519, %s520
        %s522 = smul.addr %s521, 8
        %s523 = scalar_lea.vmem %s0, %s522
        %p524 = pneg %p73
        %p525 = pneg %p70
        %p526 = pneg %p94
        %p527 = pneg %p91
        %p528 = pneg %p115
        %p529 = pneg %p112
        %p530 = pneg %p136
        %p531 = pneg %p133
        %p532 = pneg %p157
        %p533 = pneg %p154
        %p534 = pneg %p178
        %p535 = pneg %p175
        %p536 = pneg %p199
        %p537 = pneg %p196
        %p538 = pneg %p220
        %p539 = pneg %p217
        %p540 = pneg %p241
        %p541 = pneg %p238
        %p542 = pneg %p262
        %p543 = pneg %p259
        %p544 = pneg %p283
        %p545 = pneg %p280
        %p546 = pneg %p304
        %p547 = pneg %p301
        %p548 = pneg %p332
        %p549 = pneg %p329
        %s550 = sand.u32 %s319, 1
        %s551 = scalar_lea.sflag [#allocation4], %s550
        %s552 = sand.u32 %s319, 1
        %s553 = smul.addr %s552, 8
        %s554 = scalar_lea.vmem [#allocation7], %s553
        %p555 = pneg %p360
        %p556 = pneg %p357
        %s557 = sand.u32 %s38, 1
        %s558 = scalar_lea.sflag [#allocation9], %s557
        %s559 = sand.u32 %s347, 1
        %s560 = smul.addr %s559, 8
        %s561 = scalar_lea.vmem [#allocation8], %s560
        %p562 = pneg %p388
        %p563 = pneg %p385
        %s564 = sand.u32 %s38, 1
        %s565 = scalar_lea.sflag [#allocation9], %s564
        %s566 = sand.u32 %s375, 1
        %s567 = smul.addr %s566, 8
        %s568 = scalar_lea.vmem [#allocation10], %s567
        %p569 = pneg %p416
        %p570 = pneg %p413
        %s571 = sand.u32 %s403, 1
        %s572 = scalar_lea.sflag [#allocation12], %s571
        %s573 = sand.u32 %s403, 1
        %s574 = smul.addr %s573, 8
        %s575 = scalar_lea.vmem [#allocation11], %s574
        %p576 = scmp.lt.s32.totalorder %s42, 1
        %s577 = scalar_select %p576, %s42, 1
        %p578 = scmp.lt.s32.totalorder %s43, 1
        %s579 = scalar_select %p578, %s43, 1
        %s580 = smul.addr %s577, 2
        %s581 = sadd.s32 %s579, %s580
        %s582 = smul.addr %s581, 8
        %s583 = scalar_lea.vmem %s0, %s582
        %v584 = vld [vmem:[%s583] sm:$0xff]
        %vm585 = vcmask 261120
        %v586 = vsel %vm585, %v584, 0.0
        %587 = vadd.xlane.f32.xlu0 %v586
        %v588 = vpop.xlane.xlu0 %587
        %v589 = vrcp.pop 32.0
        %v590 = vmul.f32 32.0, %v589
        %v591 = vsub.f32 1.0, %v590
        %v592 = vmul.f32 %v589, %v591
        %v593 = vadd.f32 %v589, %v592
        %vm594 = vweird.f32 %v589
        %v595 = vsel %vm594, %v589, %v593
        %v596 = vmul.f32 %v588, %v595
        %v597 = vsub.f32 %v584, %v596
        %v598 = vmul.f32 %v597, %v597
        %v599 = vsel %vm585, %v598, 0.0
        %600 = vadd.xlane.f32.xlu0 %v599
        %v601 = vpop.xlane.xlu0 %600
        %v602 = vmul.f32 %v601, %v595
        %v603 = vadd.f32 %v602, 1e-05
        %v604 = vrsqrt.pop %v603
        %v605 = vmul.f32 %v604, %v603
        %v606 = vmul.f32 %v605, %v604
        %v607 = vmul.f32 0.5, %v606
        %v608 = vsub.f32 1.5, %v607
        %v609 = vmul.f32 %v604, %v608
        %vm610 = vweird.f32 %v603
        %vm611 = vweird.f32 %v604
        %vm612 = vmor %vm610, %vm611
        %v613 = vsel %vm612, %v604, %v609
        %v614 = vmul.f32 %v597, %v613
        %v615 = vld [vmem:[#allocation2] sm:$0x1]
        %v617 = vperm.slane %v615, 0
        %v619 = vmul.f32 %v614, %v617
        %v620 = vld [vmem:[%s2] sm:$0x1]
        %v622 = vperm.slane %v620, 0
        %v624 = vadd.f32 %v619, %v622
        %v625 = vld [vmem:[%s3] sm:$0xff]
        %v626 = vld [vmem:[%s3 + $0x8] sm:$0xff]
        %v627 = vld [vmem:[%s3 + $0x10] sm:$0xff]
        %v628 = vld [vmem:[%s3 + $0x18] sm:$0xff]
        %v630 = vsel %vm585, %v624, 0
        %632 = vmatpush.msra.mxu0 0.0
        %633 = vmatpush.msra.mxu0 0.0
        %634 = vmatpush.msra.mxu0 0.0
        %635 = vmatpush.msra.mxu0 0.0
        %636 = vmatpush.msra.mxu0 0.0
        %637 = vmatpush.msra.mxu0 0.0
        %638 = vmatpush.msra.mxu0 0.0
        %639 = vmatpush.msra.mxu0 0.0
        %640 = vmatpush.msra.mxu0 0.0
        %641 = vmatpush.msra.mxu0 0.0
        %642 = vmatpush.msra.mxu0 0.0
        %643 = vmatpush.msra.mxu0 0.0
        %644 = vmatpush.msra.mxu0 %v628
        %645 = vmatpush.msra.mxu0 %v627
        %646 = vmatpush.msra.mxu0 %v626
        %647 = vmatpush.msra.mxu0 %v625
        %648 = vmatmul.f32.gmra.mxu0 %v630
        %v649 = vpop.f32.mrf.mxu0
        %v650 = vadd.f32 0.0, %v649
        %651 = vdwg.mxu0
        %v652 = vmul.f32 %v650, 0.25
        %v653 = vld [vmem:[%s4] sm:$0xff]
        %v654 = vld [vmem:[%s4 + $0x8] sm:$0xff]
        %v655 = vld [vmem:[%s4 + $0x10] sm:$0xff]
        %v656 = vld [vmem:[%s4 + $0x18] sm:$0xff]
        %657 = vmatpush.msra.mxu0 0.0
        %658 = vmatpush.msra.mxu0 0.0
        %659 = vmatpush.msra.mxu0 0.0
        %660 = vmatpush.msra.mxu0 0.0
        %661 = vmatpush.msra.mxu0 0.0
        %662 = vmatpush.msra.mxu0 0.0
        %663 = vmatpush.msra.mxu0 0.0
        %664 = vmatpush.msra.mxu0 0.0
        %665 = vmatpush.msra.mxu0 0.0
        %666 = vmatpush.msra.mxu0 0.0
        %667 = vmatpush.msra.mxu0 0.0
        %668 = vmatpush.msra.mxu0 0.0
        %669 = vmatpush.msra.mxu0 %v656
        %670 = vmatpush.msra.mxu0 %v655
        %671 = vmatpush.msra.mxu0 %v654
        %672 = vmatpush.msra.mxu0 %v653
        %673 = vmatmul.f32.gmra.mxu0 %v630
        %v674 = vpop.f32.mrf.mxu0
        %v675 = vadd.f32 0.0, %v674
        %676 = vdwg.mxu0
        %v677 = vld [vmem:[%s5] sm:$0xff]
        %v678 = vld [vmem:[%s5 + $0x8] sm:$0xff]
        %v679 = vld [vmem:[%s5 + $0x10] sm:$0xff]
        %v680 = vld [vmem:[%s5 + $0x18] sm:$0xff]
        %681 = vmatpush.msra.mxu0 0.0
        %682 = vmatpush.msra.mxu0 0.0
        %683 = vmatpush.msra.mxu0 0.0
        %684 = vmatpush.msra.mxu0 0.0
        %685 = vmatpush.msra.mxu0 0.0
        %686 = vmatpush.msra.mxu0 0.0
        %687 = vmatpush.msra.mxu0 0.0
        %688 = vmatpush.msra.mxu0 0.0
        %689 = vmatpush.msra.mxu0 0.0
        %690 = vmatpush.msra.mxu0 0.0
        %691 = vmatpush.msra.mxu0 0.0
        %692 = vmatpush.msra.mxu0 0.0
        %693 = vmatpush.msra.mxu0 %v680
        %694 = vmatpush.msra.mxu0 %v679
        %695 = vmatpush.msra.mxu0 %v678
        %696 = vmatpush.msra.mxu0 %v677
        %697 = vmatmul.f32.gmra.mxu0 %v630
        %v698 = vpop.f32.mrf.mxu0
        %v699 = vadd.f32 0.0, %v698
        %700 = vdwg.mxu0
        %701 = vst.msk [vmem:[%s554] sm:$0xff] %vm585, %v652
        %702 = vst.msk [vmem:[%s561] sm:$0xff] %vm585, %v675
        %703 = vst.msk [vmem:[%s568] sm:$0xff] %vm585, %v699
        %v704 = vld [vmem:[%s6] sm:$0xff]
        %v705 = vld [vmem:[%s6 + $0x8] sm:$0xff]
        %v706 = vld [vmem:[%s6 + $0x10] sm:$0xff]
        %v707 = vld [vmem:[%s6 + $0x18] sm:$0xff]
        %v708 = vld [vmem:[%s8] sm:$0x1]
        %v710 = vperm.slane %v708, 0
        %712 = vmatpush.msra.mxu0 0.0
        %713 = vmatpush.msra.mxu0 0.0
        %714 = vmatpush.msra.mxu0 0.0
        %715 = vmatpush.msra.mxu0 0.0
        %716 = vmatpush.msra.mxu0 0.0
        %717 = vmatpush.msra.mxu0 0.0
        %718 = vmatpush.msra.mxu0 0.0
        %719 = vmatpush.msra.mxu0 0.0
        %720 = vmatpush.msra.mxu0 0.0
        %721 = vmatpush.msra.mxu0 0.0
        %722 = vmatpush.msra.mxu0 0.0
        %723 = vmatpush.msra.mxu0 0.0
        %724 = vmatpush.msra.mxu0 %v707
        %725 = vmatpush.msra.mxu0 %v706
        %726 = vmatpush.msra.mxu0 %v705
        %727 = vmatpush.msra.mxu0 %v704
        %728 = vmatmul.f32.gmra.mxu0 %v630
        %v729 = vpop.f32.mrf.mxu0
        %v730 = vadd.f32 %v710, %v729
        %731 = vdwg.mxu0
        %v732 = vld [vmem:[#allocation5] sm:$0xff]
        %v733 = vld [vmem:[#allocation5 + $0x8] sm:$0xff]
        %v734 = vld [vmem:[#allocation5 + $0x10] sm:$0xff]
        %v735 = vld [vmem:[#allocation5 + $0x18] sm:$0xff]
        %v736 = vld [vmem:[%s9] sm:$0x1]
        %v738 = vperm.slane %v736, 0
        %740 = vmatpush.msra.mxu0 0.0
        %741 = vmatpush.msra.mxu0 0.0
        %742 = vmatpush.msra.mxu0 0.0
        %743 = vmatpush.msra.mxu0 0.0
        %744 = vmatpush.msra.mxu0 0.0
        %745 = vmatpush.msra.mxu0 0.0
        %746 = vmatpush.msra.mxu0 0.0
        %747 = vmatpush.msra.mxu0 0.0
        %748 = vmatpush.msra.mxu0 0.0
        %749 = vmatpush.msra.mxu0 0.0
        %750 = vmatpush.msra.mxu0 0.0
        %751 = vmatpush.msra.mxu0 0.0
        %752 = vmatpush.msra.mxu0 %v735
        %753 = vmatpush.msra.mxu0 %v734
        %754 = vmatpush.msra.mxu0 %v733
        %755 = vmatpush.msra.mxu0 %v732
        %756 = vmatmul.f32.gmra.mxu0 %v630
        %v757 = vpop.f32.mrf.mxu0
        %v758 = vadd.f32 %v738, %v757
        %759 = vdwg.mxu0
        %v760 = vxor.u32 %v758, 2147483648
        %v761 = vmul.f32 %v760, 1.442695
        %v762 = vpow.pop %v761
        %v763 = vadd.f32 %v762, 1.0
        %v764 = vrcp.pop %v763
        %v765 = vmul.f32 %v763, %v764
        %v766 = vsub.f32 1.0, %v765
        %v767 = vmul.f32 %v764, %v766
        %v768 = vadd.f32 %v764, %v767
        %vm769 = vweird.f32 %v763
        %vm770 = vweird.f32 %v764
        %vm771 = vmor %vm769, %vm770
        %v772 = vsel %vm771, %v764, %v768
        %v773 = vand.u32 2147483647, %v763
        %vm774 = vcmp.eq.f32.partialorder %v773, 8.507059e+37
        %v775 = vand.u32 %v763, 2147483648
        %v776 = vor.u32 1.1754944e-38, %v775
        %v777 = vsel %vm774, %v776, %v772
        %v778 = vmul.f32 1.0, %v777
        %v779 = vmul.f32 %v758, %v778
        %v780 = vmul.f32 %v730, %v779
        %v781 = vld [vmem:[%s10] sm:$0xff]
        %v782 = vld [vmem:[%s10 + $0x8] sm:$0xff]
        %v783 = vld [vmem:[%s10 + $0x10] sm:$0xff]
        %v784 = vld [vmem:[%s10 + $0x18] sm:$0xff]
        %v785 = vld [vmem:[%s10 + $0x20] sm:$0xff]
        %v786 = vld [vmem:[%s10 + $0x28] sm:$0xff]
        %v787 = vld [vmem:[%s10 + $0x30] sm:$0xff]
        %v788 = vld [vmem:[%s10 + $0x38] sm:$0xff]
        %v789 = vld [vmem:[%s10 + $0x40] sm:$0xff]
        %v790 = vld [vmem:[%s10 + $0x48] sm:$0xff]
        %v791 = vld [vmem:[%s10 + $0x50] sm:$0xff]
        %v792 = vld [vmem:[%s10 + $0x58] sm:$0xff]
        %v793 = vld [vmem:[%s10 + $0x60] sm:$0xff]
        %v794 = vld [vmem:[%s10 + $0x68] sm:$0xff]
        %v795 = vld [vmem:[%s10 + $0x70] sm:$0xff]
        %v796 = vld [vmem:[%s10 + $0x78] sm:$0xff]
        %v797 = vld [vmem:[%s11] sm:$0x1]
        %v799 = vperm.slane %v797, 0
        %801 = vmatpush.msra.mxu0 %v796
        %802 = vmatpush.msra.mxu0 %v795
        %803 = vmatpush.msra.mxu0 %v794
        %804 = vmatpush.msra.mxu0 %v793
        %805 = vmatpush.msra.mxu0 %v792
        %806 = vmatpush.msra.mxu0 %v791
        %807 = vmatpush.msra.mxu0 %v790
        %808 = vmatpush.msra.mxu0 %v789
        %809 = vmatpush.msra.mxu0 %v788
        %810 = vmatpush.msra.mxu0 %v787
        %811 = vmatpush.msra.mxu0 %v786
        %812 = vmatpush.msra.mxu0 %v785
        %813 = vmatpush.msra.mxu0 %v784
        %814 = vmatpush.msra.mxu0 %v783
        %815 = vmatpush.msra.mxu0 %v782
        %816 = vmatpush.msra.mxu0 %v781
        %817 = vmatmul.f32.gmra.mxu0 %v780
        %v818 = vpop.f32.mrf.mxu0
        %v819 = vadd.f32 %v799, %v818
        %820 = vdwg.mxu0
        %821 = vst.msk [vmem:[%s575] sm:$0xff] %vm585, %v819
        %s822 = sand.u32 %s319, 1
        %s823 = scalar_lea.sflag [#allocation4], %s822
        %s824 = sand.u32 %s319, 1
        %s825 = smul.addr %s824, 8
        %s826 = scalar_lea.vmem [#allocation7], %s825
        %s827 = sand.u32 %s38, 1
        %s828 = scalar_lea.sflag [#allocation9], %s827
        %s829 = sand.u32 %s347, 1
        %s830 = smul.addr %s829, 8
        %s831 = scalar_lea.vmem [#allocation8], %s830
        %s832 = sand.u32 %s38, 1
        %s833 = scalar_lea.sflag [#allocation9], %s832
        %s834 = sand.u32 %s375, 1
        %s835 = smul.addr %s834, 8
        %s836 = scalar_lea.vmem [#allocation10], %s835
        %s837 = sand.u32 %s403, 1
        %s838 = scalar_lea.sflag [#allocation12], %s837
        %s839 = sand.u32 %s403, 1
        %s840 = smul.addr %s839, 8
        %s841 = scalar_lea.vmem [#allocation11], %s840
        // Predicated region
        $region77: #{tpu_custom_call.1} parent=67 // pred_check
          %p842 = pneg %p329
        $region78: #{tpu_custom_call.1} parent=67 // pred_check_branch
          %844 = sbr.rel (%p842) target = $region80
        $region79: #{tpu_custom_call.1} parent=67 // pred_region
          %846 = vsyncadd %s823, 0
          %s847 = smul.addr %s42, 2
          %s848 = sadd.s32 %s43, %s847
          %s849 = smul.addr %s848, 8
          %s850 = scalar_lea.hbm %s12, %s849
          %s852 = sshll.u32 %s826, 4
          %s853 = int_to_ptr.vmem [resolvable:$true] %s852
          %s854 = sshll.u32 %s850, 4
          %s855 = int_to_ptr.hbm [resolvable:$true] %s854
          %857 = dma.vmem_to_hbm [thread:$0]  %s853, 128, %s855, %s823
        $region80: #{tpu_custom_call.1} parent=67 // pred_fallthru
          _
        // Predicated region
        $region81: #{tpu_custom_call.1} parent=67 // pred_check
          %p858 = pneg %p357
        $region82: #{tpu_custom_call.1} parent=67 // pred_check_branch
          %860 = sbr.rel (%p858) target = $region84
        $region83: #{tpu_custom_call.1} parent=67 // pred_region
          %862 = vsyncadd %s828, 0
          %s863 = smul.addr %s42, 2
          %s864 = sadd.s32 %s43, %s863
          %s865 = smul.addr %s864, 8
          %s866 = scalar_lea.hbm %s13, %s865
          %s868 = sshll.u32 %s831, 4
          %s869 = int_to_ptr.vmem [resolvable:$true] %s868
          %s870 = sshll.u32 %s866, 4
          %s871 = int_to_ptr.hbm [resolvable:$true] %s870
          %873 = dma.vmem_to_hbm [thread:$0]  %s869, 128, %s871, %s828
        $region84: #{tpu_custom_call.1} parent=67 // pred_fallthru
          _
        // Predicated region
        $region85: #{tpu_custom_call.1} parent=67 // pred_check
          %p874 = pneg %p385
        $region86: #{tpu_custom_call.1} parent=67 // pred_check_branch
          %876 = sbr.rel (%p874) target = $region88
        $region87: #{tpu_custom_call.1} parent=67 // pred_region
          %878 = vsyncadd %s833, 0
          %s879 = smul.addr %s42, 2
          %s880 = sadd.s32 %s43, %s879
          %s881 = smul.addr %s880, 8
          %s882 = scalar_lea.hbm %s14, %s881
          %s884 = sshll.u32 %s836, 4
          %s885 = int_to_ptr.vmem [resolvable:$true] %s884
          %s886 = sshll.u32 %s882, 4
          %s887 = int_to_ptr.hbm [resolvable:$true] %s886
          %889 = dma.vmem_to_hbm [thread:$0]  %s885, 128, %s887, %s833
        $region88: #{tpu_custom_call.1} parent=67 // pred_fallthru
          _
        // Predicated region
        $region89: #{tpu_custom_call.1} parent=67 // pred_check
          %p890 = pneg %p413
        $region90: #{tpu_custom_call.1} parent=67 // pred_check_branch
          %892 = sbr.rel (%p890) target = $region92
        $region91: #{tpu_custom_call.1} parent=67 // pred_region
          %894 = vsyncadd %s838, 0
          %s895 = smul.addr %s42, 2
          %s896 = sadd.s32 %s43, %s895
          %s897 = smul.addr %s896, 8
          %s898 = scalar_lea.hbm %s15, %s897
          %s900 = sshll.u32 %s841, 4
          %s901 = int_to_ptr.vmem [resolvable:$true] %s900
          %s902 = sshll.u32 %s898, 4
          %s903 = int_to_ptr.hbm [resolvable:$true] %s902
          %905 = dma.vmem_to_hbm [thread:$0]  %s901, 128, %s903, %s838
        $region92: #{tpu_custom_call.1} parent=67 // pred_fallthru
          _
      $region68: #{tpu_custom_call.1} parent=5 // pred_fallthru
        _
      %p906 = scmp.le.s32.totalorder 2, %s33
      // Predicated region
      $region93: #{tpu_custom_call.1} parent=5 // pred_check
        %p907 = pneg %p906
      $region94: #{tpu_custom_call.1} parent=5 // pred_check_branch
        %909 = sbr.rel (%p907) target = $region96
      $region95: #{tpu_custom_call.1} parent=5 // pred_region
        %s910 = ssub.s32 %s33, 2
        // Predicated region
        $region97: #{tpu_custom_call.1} parent=95 // pred_check
          %p911 = pneg %p335
        $region98: #{tpu_custom_call.1} parent=95 // pred_check_branch
          %913 = sbr.rel (%p911) target = $region100
        $region99: #{tpu_custom_call.1} parent=95 // pred_region
          %s914 = sand.u32 %s320, 1
          %s915 = scalar_lea.sflag [#allocation4], %s914
          %s916 = sand.u32 %s320, 1
          %s917 = smul.addr %s916, 8
          %s918 = scalar_lea.vmem [#allocation7], %s917
          %920 = dma.done %s915, 128
        $region100: #{tpu_custom_call.1} parent=95 // pred_fallthru
          _
        // Predicated region
        $region101: #{tpu_custom_call.1} parent=95 // pred_check
          %p921 = pneg %p363
        $region102: #{tpu_custom_call.1} parent=95 // pred_check_branch
          %923 = sbr.rel (%p921) target = $region104
        $region103: #{tpu_custom_call.1} parent=95 // pred_region
          %s924 = sand.u32 %s39, 1
          %s925 = scalar_lea.sflag [#allocation9], %s924
          %s926 = sand.u32 %s348, 1
          %s927 = smul.addr %s926, 8
          %s928 = scalar_lea.vmem [#allocation8], %s927
          %930 = dma.done %s925, 128
        $region104: #{tpu_custom_call.1} parent=95 // pred_fallthru
          _
        // Predicated region
        $region105: #{tpu_custom_call.1} parent=95 // pred_check
          %p931 = pneg %p391
        $region106: #{tpu_custom_call.1} parent=95 // pred_check_branch
          %933 = sbr.rel (%p931) target = $region108
        $region107: #{tpu_custom_call.1} parent=95 // pred_region
          %s934 = sand.u32 %s39, 1
          %s935 = scalar_lea.sflag [#allocation9], %s934
          %s936 = sand.u32 %s376, 1
          %s937 = smul.addr %s936, 8
          %s938 = scalar_lea.vmem [#allocation10], %s937
          %940 = dma.done %s935, 128
        $region108: #{tpu_custom_call.1} parent=95 // pred_fallthru
          _
        // Predicated region
        $region109: #{tpu_custom_call.1} parent=95 // pred_check
          %p941 = pneg %p419
        $region110: #{tpu_custom_call.1} parent=95 // pred_check_branch
          %943 = sbr.rel (%p941) target = $region112
        $region111: #{tpu_custom_call.1} parent=95 // pred_region
          %s944 = sand.u32 %s404, 1
          %s945 = scalar_lea.sflag [#allocation12], %s944
          %s946 = sand.u32 %s404, 1
          %s947 = smul.addr %s946, 8
          %s948 = scalar_lea.vmem [#allocation11], %s947
          %950 = dma.done %s945, 128
        $region112: #{tpu_custom_call.1} parent=95 // pred_fallthru
          _
      $region96: #{tpu_custom_call.1} parent=5 // pred_fallthru
        _
    $region6: #{tpu_custom_call.1} parent=1 // loop_footer
      %s37 = sadd.s32 1, %s33
    $region7: #{tpu_custom_call.1} parent=1 // loop_footer_branch
      %32 = sbr.rel target = $region3
    $region8: #{tpu_custom_call.1} parent=1 // loop_exit
      _
    %951 = vsyncpa [#allocation3], 1
    %s952 = scalar_lea.sflag [#allocation3], 1
    %953 = vsyncpa %s952, 1
    %954 = vsyncpa [#allocation6], 1
    %955 = vsyncpa [#allocation4], 1
    %s956 = scalar_lea.sflag [#allocation4], 1
    %957 = vsyncpa %s956, 1
    %958 = vsyncpa [#allocation9], 1
    %s959 = scalar_lea.sflag [#allocation9], 1
    %960 = vsyncpa %s959, 1
    %961 = vsyncpa [#allocation12], 1
    %s962 = scalar_lea.sflag [#allocation12], 1
    %963 = vsyncpa %s962, 1

</llo_original>
